<compile_context>
chip_gen: v7x
topology: tpu7x:2x2x1
jax: 0.10.0
libtpu: 0.0.40
codegen_flags: <defaults>
</compile_context>

<pallas_src>
import jax
import jax.numpy as jnp
from jax.experimental import pallas as pl
from jax.experimental.pallas import tpu as pltpu


def _round_up(x: int, m: int) -> int:
    return (x + m - 1) // m * m


def classifier_kernel(x_ref, w_ref, b_ref, o_ref, acc_ref):
    """out[i-tile, j-tile] = sum_k x[i, k] @ w[k, j] + b[j] (f32 accumulate)."""
    k = pl.program_id(2)

    @pl.when(k == 0)
    def _():
        acc_ref[...] = jnp.zeros_like(acc_ref)

    acc_ref[...] += jnp.dot(
        x_ref[...], w_ref[...], preferred_element_type=jnp.float32
    )

    @pl.when(k == pl.num_programs(2) - 1)
    def _():
        o_ref[...] = (acc_ref[...] + b_ref[...]).astype(o_ref.dtype)


def _pallas_linear(x_pad, w_pad, b_pad, tm, tn, tk):
    n_pad, d_pad = x_pad.shape
    k_pad = w_pad.shape[1]
    grid = (n_pad // tm, k_pad // tn, d_pad // tk)

    bytes_accessed = (
        x_pad.size * x_pad.dtype.itemsize
        + w_pad.size * w_pad.dtype.itemsize
        + b_pad.size * b_pad.dtype.itemsize
        + n_pad * k_pad * 4
    )
    cost = pl.CostEstimate(
        flops=2 * n_pad * d_pad * k_pad,
        transcendentals=0,
        bytes_accessed=bytes_accessed,
    )

    return pl.pallas_call(
        classifier_kernel,
        out_shape=jax.ShapeDtypeStruct((n_pad, k_pad), jnp.float32),
        grid_spec=pltpu.PrefetchScalarGridSpec(
            num_scalar_prefetch=0,
            grid=grid,
            in_specs=[
                pl.BlockSpec((tm, tk), lambda i, j, k: (i, k)),   # x tile
                pl.BlockSpec((tk, tn), lambda i, j, k: (k, j)),   # W' tile
                pl.BlockSpec((1, tn), lambda i, j, k: (0, j)),    # b' tile
            ],
            out_specs=pl.BlockSpec((tm, tn), lambda i, j, k: (i, j)),
            scratch_shapes=[pltpu.VMEM((tm, tn), jnp.float32)],
        ),
        compiler_params=pltpu.CompilerParams(
            dimension_semantics=("parallel", "parallel", "arbitrary"),
            vmem_limit_bytes=32 * 1024 * 1024,  # safe on v5e/v6e/v7x; tiles are small
        ),
        cost_estimate=cost,
    )(x_pad, w_pad, b_pad)


def _pick_reduction_tile(d_pad: int) -> int:
    """Largest tk <= 512 (multiple of 128) that divides the padded D."""
    for tk in (512, 384, 256, 128):
        if d_pad % tk == 0:
            return tk
    return 128


def make_classifier_forward(mean_c, std_c, w, b, image_hw,
                            compute_dtype=jnp.bfloat16):
    """Builds a jitted forward equivalent to Classifier.forward.

    All per-call-constant work (normalization folding into W'/b', padding,
    weight dtype casts) is done once here, so the pallas_call is the only
    per-step work.
    """
    if mean_c is None or std_c is None:
        # normalize=None: the PyTorch forward returns the inputs unchanged.
        return jax.jit(lambda x: x)

    img_h, img_w = image_hw
    hw = img_h * img_w
    D, K = w.shape

    # --- Fold (x - mean) / std into the linear head (f32, done once) ---------
    inv_std_c = 1.0 / std_c.astype(jnp.float32)
    inv_std_f = jnp.repeat(inv_std_c, hw)                         # (D,) NCHW order
    mean_f = jnp.repeat(mean_c.astype(jnp.float32), hw)           # (D,)
    w_f32 = w.astype(jnp.float32)
    w_folded = w_f32 * inv_std_f[:, None]                         # (D, K)
    b_folded = b.astype(jnp.float32) - (mean_f * inv_std_f) @ w_f32  # (K,)

    # --- Tile sizes & padded, hoisted operands --------------------------------
    tn = 128                                    # lane-dense output / weight tiles
    d_pad = _round_up(D, 128)
    tk = _pick_reduction_tile(d_pad)
    k_pad = _round_up(K, tn)

    w_padded = (
        jnp.zeros((d_pad, k_pad), jnp.float32)
        .at[:D, :K].set(w_folded)
        .astype(compute_dtype)
    )
    b_padded = jnp.zeros((1, k_pad), jnp.float32).at[0, :K].set(b_folded)

    @jax.jit
    def forward(x_nchw):
        n = x_nchw.shape[0]
        tm = min(128, _round_up(n, 8))          # sublane-aligned batch tile
        n_pad = _round_up(n, tm)
        x2 = x_nchw.reshape(n, -1).astype(compute_dtype)
        if n_pad == n and d_pad == D:
            x_padded = x2
        else:
            x_padded = jnp.zeros((n_pad, d_pad), compute_dtype).at[:n, :D].set(x2)
        out_padded = _pallas_linear(x_padded, w_padded, b_padded, tm, tn, tk)
        return out_padded[:n, :K]

    return forward


if __name__ == "__main__":
    # Small deterministic example: batch=2, channels=4, spatial=16x16, classes=10.
    N, C, H, W = 2, 4, 16, 16
    K = 10
    D = C * H * W

    key = jax.random.PRNGKey(0)
    kx, kw, kb = jax.random.split(key, 3)

    x = jax.random.normal(kx, (N, C, H, W), dtype=jnp.float32)
    mean_c = jnp.array([0.485, 0.456, 0.406, 0.50], dtype=jnp.float32)
    std_c = jnp.array([0.229, 0.224, 0.225, 0.25], dtype=jnp.float32)
    w = jax.random.normal(kw, (D, K), dtype=jnp.float32) * 0.02
    b = jax.random.normal(kb, (K,), dtype=jnp.float32) * 0.01

    # Reference in plain JAX (same semantics as the PyTorch forward, f32).
    xn_ref = (x - mean_c[None, :, None, None]) / std_c[None, :, None, None]
    ref = xn_ref.reshape(N, D) @ w + b

    # f32 compute path: tight match against the reference.
    fwd_f32 = make_classifier_forward(mean_c, std_c, w, b, (H, W),
                                      compute_dtype=jnp.float32)
    out_f32 = jax.block_until_ready(fwd_f32(x))
    assert out_f32.shape == (N, K)
    assert jnp.allclose(out_f32, ref, atol=1e-4, rtol=1e-4), "f32 mismatch vs reference"

    # bf16 compute path (default, halves HBM traffic): loose match (bf16 MXU operands).
    fwd_bf16 = make_classifier_forward(mean_c, std_c, w, b, (H, W))
    out_bf16 = jax.block_until_ready(fwd_bf16(x))
    assert out_bf16.shape == (N, K)
    assert jnp.allclose(out_bf16, ref, atol=1e-1, rtol=5e-2), "bf16 mismatch vs reference"

    # normalize=None path: forward returns inputs unchanged (as in the module).
    ident = make_classifier_forward(None, None, w, b, (H, W))
    passthrough = jax.block_until_ready(ident(x))
    assert passthrough.shape == x.shape
    assert jnp.allclose(passthrough, x)

    print("KERNEL_OK")
</pallas_src>

<mosaic_0001>
module attributes {stable_mosaic.version = 11 : i64} {
  func.func @classifier_kernel(%arg0: i32, %arg1: i32, %arg2: i32, %arg3: memref<8x512xf32, #tpu.memory_space<vmem>>, %arg4: memref<512x128xf32, #tpu.memory_space<vmem>>, %arg5: memref<1x128xf32, #tpu.memory_space<vmem>>, %arg6: memref<8x128xf32, #tpu.memory_space<vmem>>, %arg7: memref<8x128xf32, #tpu.memory_space<vmem>>) attributes {dimension_semantics = [#tpu.dimension_semantics<parallel>, #tpu.dimension_semantics<parallel>, #tpu.dimension_semantics<arbitrary>], iteration_bounds = array<i64: 1, 1, 2>, scalar_prefetch = 0 : i64, scratch_operands = 1 : i64, tpu.core_type = #tpu.core_type<tc>, window_params = [{transform_indices = @transform_0, window_bounds = array<i64: 8, 512>}, {transform_indices = @transform_1, window_bounds = array<i64: 512, 128>}, {transform_indices = @transform_2, window_bounds = array<i64: 1, 128>}, {transform_indices = @transform_3, window_bounds = array<i64: 8, 128>}]} {
    %c0_i32 = arith.constant 0 : i32
    %0 = arith.cmpi eq, %arg2, %c0_i32 : i32
    %1 = arith.extui %0 : i1 to i32
    %c0_i32_0 = arith.constant 0 : i32
    %2 = arith.cmpi ne, %1, %c0_i32_0 : i32
    scf.if %2 {
      %cst_9 = arith.constant 0.000000e+00 : f32
      %12 = vector.broadcast %cst_9 : f32 to vector<8x128xf32>
      %c0_10 = arith.constant 0 : index
      %c0_11 = arith.constant 0 : index
      %13 = vector.load %arg7[%c0_10, %c0_11] : memref<8x128xf32, #tpu.memory_space<vmem>>, vector<8x128xf32>
      tpu.vector_store %arg7[%c0_10, %c0_11], %12 {strides = array<i32>} : memref<8x128xf32, #tpu.memory_space<vmem>>, vector<8x128xf32>,
    } else {
    }
    %c0 = arith.constant 0 : index
    %c0_1 = arith.constant 0 : index
    %3 = vector.load %arg7[%c0, %c0_1] : memref<8x128xf32, #tpu.memory_space<vmem>>, vector<8x128xf32>
    %c0_2 = arith.constant 0 : index
    %c0_3 = arith.constant 0 : index
    %4 = vector.load %arg3[%c0_2, %c0_3] : memref<8x512xf32, #tpu.memory_space<vmem>>, vector<8x512xf32>
    %c0_4 = arith.constant 0 : index
    %c0_5 = arith.constant 0 : index
    %5 = vector.load %arg4[%c0_4, %c0_5] : memref<512x128xf32, #tpu.memory_space<vmem>>, vector<512x128xf32>
    %cst = arith.constant dense<0.000000e+00> : vector<8x128xf32>
    %6 = tpu.matmul %4, %5, %cst {dimension_numbers = #tpu.dot_dimension_numbers<[1], [0], [0], [1], [0, 0, 1, 1], [], []>} : vector<8x512xf32>, vector<512x128xf32>, vector<8x128xf32> -> vector<8x128xf32>
    %7 = arith.addf %3, %6 : vector<8x128xf32>
    %c0_6 = arith.constant 0 : index
    %c0_7 = arith.constant 0 : index
    %8 = vector.load %arg7[%c0_6, %c0_7] : memref<8x128xf32, #tpu.memory_space<vmem>>, vector<8x128xf32>
    tpu.vector_store %arg7[%c0_6, %c0_7], %7 {strides = array<i32>} : memref<8x128xf32, #tpu.memory_space<vmem>>, vector<8x128xf32>,
    %c1_i32 = arith.constant 1 : i32
    %9 = arith.cmpi eq, %arg2, %c1_i32 : i32
    %10 = arith.extui %9 : i1 to i32
    %c0_i32_8 = arith.constant 0 : i32
    %11 = arith.cmpi ne, %10, %c0_i32_8 : i32
    scf.if %11 {
      %c0_9 = arith.constant 0 : index
      %c0_10 = arith.constant 0 : index
      %12 = vector.load %arg7[%c0_9, %c0_10] : memref<8x128xf32, #tpu.memory_space<vmem>>, vector<8x128xf32>
      %c0_11 = arith.constant 0 : index
      %c0_12 = arith.constant 0 : index
      %13 = vector.load %arg5[%c0_11, %c0_12] : memref<1x128xf32, #tpu.memory_space<vmem>>, vector<1x128xf32>
      %14 = vector.broadcast %13 : vector<1x128xf32> to vector<8x128xf32>
      %15 = arith.addf %12, %14 : vector<8x128xf32>
      %c0_13 = arith.constant 0 : index
      %c0_14 = arith.constant 0 : index
      %16 = vector.load %arg6[%c0_13, %c0_14] : memref<8x128xf32, #tpu.memory_space<vmem>>, vector<8x128xf32>
      tpu.vector_store %arg6[%c0_13, %c0_14], %15 {strides = array<i32>} : memref<8x128xf32, #tpu.memory_space<vmem>>, vector<8x128xf32>,
    } else {
    }
    return
  }
  func.func @transform_0(%arg0: i32, %arg1: i32, %arg2: i32) -> (i32, i32) {
    %c0_i32 = arith.constant 0 : i32
    return %arg0, %arg2 : i32, i32
  }
  func.func @transform_1(%arg0: i32, %arg1: i32, %arg2: i32) -> (i32, i32) {
    %c0_i32 = arith.constant 0 : i32
    return %arg2, %arg1 : i32, i32
  }
  func.func @transform_2(%arg0: i32, %arg1: i32, %arg2: i32) -> (i32, i32) {
    %c0_i32 = arith.constant 0 : i32
    %c0_i32_0 = arith.constant 0 : i32
    return %c0_i32, %arg1 : i32, i32
  }
  func.func @transform_3(%arg0: i32, %arg1: i32, %arg2: i32) -> (i32, i32) {
    %c0_i32 = arith.constant 0 : i32
    return %arg0, %arg1 : i32, i32
  }
}

</mosaic_0001>

<llo_original>
// kernel: forward.1
$region0: #{forward.1}
  #allocation0 [shape = 'u32[]', space=smem, size = 0x4, offset = 0x4, fixed_abs, tag = 'smem constant byte address 0x4 - core index']
  #allocation1 [shape = 'u32[144,128]{1,0:T(1,128)}', space=vmem, size = 0x12000, scoped, tag = 'internal scratch']
  #allocation2 [shape = 'f32[8,128]{1,0:T(8,128)}', space=vmem, size = 0x1000, scoped, tag = 'scratch operand']
  %s0 = inlined_call_operand.vmem [shape: f32[8,1024], index: 0, kind: input, shape index: {}]
  %s1 = inlined_call_operand.hbm [shape: f32[1024,128], index: 1, kind: input, shape index: {}]
  %s2 = inlined_call_operand.vmem [shape: f32[1,128], index: 2, kind: input, shape index: {}]
  %s3 = inlined_call_operand.vmem [shape: f32[8,128], index: 3, kind: output, shape index: {}]
  %s4 = sld [smem:[#allocation0]]
  $region57: #{forward.1} parent=0
    _
  %s6 = ssub.s32 1, %s4
  %s7 = scalar_select 0, %s6, %s4
  $region1: #{forward.1} parent=0
    #allocation3 [shape = 'u8[524288]{0}', space=vmem, size = 0x80000, scoped, tag = 'input window, operand 1']
    #allocation4 [shape = 's32[2]{0}', space=sflag, size = 0x8, scoped, tag = 'scoped memory for forward.1']
    %8 = vsyncpa [#allocation4], 0
    %s9 = scalar_lea.sflag [#allocation4], 1
    %10 = vsyncpa %s9, 0
    loop: start=0, step=1, limit=4
    $region2: #{forward.1} parent=1 // loop_pre_header
      _
    $region3: #{forward.1} parent=1 // loop_header
      %s12 = sphi 0, %s16
      %p13 = scmp.ge.s32.totalorder %s12, 4
      %s19 = sphi 0, %s38
      %s20 = sphi 0, %s34
      %s21 = sphi 0, %s30
      %s22 = sphi 0, %s19
      %s23 = sphi 0, %s20
      %s24 = sphi 0, %s21
      %s25 = sphi 0, %s22
      %s26 = sphi 0, %s23
      %s27 = sphi 0, %s24
      %s43 = sphi 0, %s45
      %s46 = sphi 0, %s43
      %s47 = sphi 0, %s46
      %s63 = sphi 0, %s47
      %s71 = sphi 0, %s73
      %s74 = sphi 0, %s71
      %s75 = sphi 0, %s74
      %s91 = sphi 0, %s75
      %s97 = sphi 0, %s99
      %s100 = sphi 0, %s97
      %s101 = sphi 0, %s100
      %s117 = sphi 0, %s101
      %s125 = sphi 0, %s127
      %s128 = sphi 0, %s125
      %s129 = sphi 0, %s128
      %s145 = sphi 0, %s129
    $region4: #{forward.1} parent=1 // loop_header_branch
      %15 = sbr.rel (%p13) target = $region8
    $region5: #{forward.1} parent=1 // loop_body
      %s17 = ssub.s32 %s12, 1
      %s18 = ssub.s32 %s12, 2
      %s28 = sadd.s32 1, %s21
      %p29 = scmp.ge.s32.totalorder %s28, 2
      %s30 = scalar_select %p29, 0, %s28
      %s31 = sadd.s32 1, %s20
      %s32 = scalar_select %p29, %s31, %s20
      %p33 = scmp.ge.s32.totalorder %s32, 1
      %s34 = scalar_select %p33, 0, %s32
      %s35 = sadd.s32 1, %s19
      %s36 = scalar_select %p33, %s35, %s19
      %p37 = scmp.ge.s32.totalorder %s36, 1
      %s38 = scalar_select %p37, 0, %s36
      %s39 = ssub.s32 %s19, %s38
      %s40 = ssub.s32 %s21, %s30
      %s41 = sor.u32 %s39, %s40
      %p42 = scmp.eq.s32.totalorder %s41, 0
      %s44 = sadd.s32 %s43, 1
      %s45 = scalar_select %p42, %s43, %s44
      %p48 = pneg %p42
      %p49 = scmp.eq.s32.totalorder %s12, 1
      %p50 = por %p48, %p49
      %p51 = scmp.ne.s32.totalorder %s43, %s46
      %p52 = scmp.eq.s32.totalorder %s12, 0
      %p53 = por %p51, %p52
      %p54 = scmp.ne.s32.totalorder %s43, %s46
      %p55 = scmp.eq.s32.totalorder %s17, 1
      %p56 = por %p54, %p55
      %p57 = scmp.ne.s32.totalorder %s46, %s47
      %p58 = scmp.eq.s32.totalorder %s17, 0
      %p59 = por %p57, %p58
      %p60 = scmp.ne.s32.totalorder %s46, %s47
      %p61 = scmp.eq.s32.totalorder %s18, 1
      %p62 = por %p60, %p61
      %p64 = scmp.ne.s32.totalorder %s47, %s63
      %p65 = scmp.eq.s32.totalorder %s18, 0
      %p66 = por %p64, %p65
      %s67 = ssub.s32 %s21, %s30
      %s68 = ssub.s32 %s20, %s34
      %s69 = sor.u32 %s67, %s68
      %p70 = scmp.eq.s32.totalorder %s69, 0
      %s72 = sadd.s32 %s71, 1
      %s73 = scalar_select %p70, %s71, %s72
      %p76 = pneg %p70
      %p77 = scmp.eq.s32.totalorder %s12, 1
      %p78 = por %p76, %p77
      %p79 = scmp.ne.s32.totalorder %s71, %s74
      %p80 = scmp.eq.s32.totalorder %s12, 0
      %p81 = por %p79, %p80
      %p82 = scmp.ne.s32.totalorder %s71, %s74
      %p83 = scmp.eq.s32.totalorder %s17, 1
      %p84 = por %p82, %p83
      %p85 = scmp.ne.s32.totalorder %s74, %s75
      %p86 = scmp.eq.s32.totalorder %s17, 0
      %p87 = por %p85, %p86
      %p88 = scmp.ne.s32.totalorder %s74, %s75
      %p89 = scmp.eq.s32.totalorder %s18, 1
      %p90 = por %p88, %p89
      %p92 = scmp.ne.s32.totalorder %s75, %s91
      %p93 = scmp.eq.s32.totalorder %s18, 0
      %p94 = por %p92, %p93
      %s95 = ssub.s32 %s20, %s34
      %p96 = scmp.eq.s32.totalorder %s95, 0
      %s98 = sadd.s32 %s97, 1
      %s99 = scalar_select %p96, %s97, %s98
      %p102 = pneg %p96
      %p103 = scmp.eq.s32.totalorder %s12, 1
      %p104 = por %p102, %p103
      %p105 = scmp.ne.s32.totalorder %s97, %s100
      %p106 = scmp.eq.s32.totalorder %s12, 0
      %p107 = por %p105, %p106
      %p108 = scmp.ne.s32.totalorder %s97, %s100
      %p109 = scmp.eq.s32.totalorder %s17, 1
      %p110 = por %p108, %p109
      %p111 = scmp.ne.s32.totalorder %s100, %s101
      %p112 = scmp.eq.s32.totalorder %s17, 0
      %p113 = por %p111, %p112
      %p114 = scmp.ne.s32.totalorder %s100, %s101
      %p115 = scmp.eq.s32.totalorder %s18, 1
      %p116 = por %p114, %p115
      %p118 = scmp.ne.s32.totalorder %s101, %s117
      %p119 = scmp.eq.s32.totalorder %s18, 0
      %p120 = por %p118, %p119
      %s121 = ssub.s32 %s19, %s38
      %s122 = ssub.s32 %s20, %s34
      %s123 = sor.u32 %s121, %s122
      %p124 = scmp.eq.s32.totalorder %s123, 0
      %s126 = sadd.s32 %s125, 1
      %s127 = scalar_select %p124, %s125, %s126
      %p130 = pneg %p124
      %p131 = scmp.eq.s32.totalorder %s12, 1
      %p132 = por %p130, %p131
      %p133 = scmp.ne.s32.totalorder %s125, %s128
      %p134 = scmp.eq.s32.totalorder %s12, 0
      %p135 = por %p133, %p134
      %p136 = scmp.ne.s32.totalorder %s125, %s128
      %p137 = scmp.eq.s32.totalorder %s17, 1
      %p138 = por %p136, %p137
      %p139 = scmp.ne.s32.totalorder %s128, %s129
      %p140 = scmp.eq.s32.totalorder %s17, 0
      %p141 = por %p139, %p140
      %p142 = scmp.ne.s32.totalorder %s128, %s129
      %p143 = scmp.eq.s32.totalorder %s18, 1
      %p144 = por %p142, %p143
      %p146 = scmp.ne.s32.totalorder %s129, %s145
      %p147 = scmp.eq.s32.totalorder %s18, 0
      %p148 = por %p146, %p147
      %p149 = scmp.le.s32.totalorder 1, %s12
      %p150 = scmp.lt.s32.totalorder %s12, 3
      %p151 = pnand %p149, %p150
      %p152 = pneg %p151
      // Predicated region
      $region9: #{forward.1} parent=5 // pred_check
        _
      $region10: #{forward.1} parent=5 // pred_check_branch
        %154 = sbr.rel (%p151) target = $region12
      $region11: #{forward.1} parent=5 // pred_region
        %s155 = ssub.s32 %s12, 1
        // Predicated region
        $region13: #{forward.1} parent=11 // pred_check
          %p156 = pneg %p113
        $region14: #{forward.1} parent=11 // pred_check_branch
          %158 = sbr.rel (%p156) target = $region16
        $region15: #{forward.1} parent=11 // pred_region
          %p159 = scmp.lt.s32.totalorder %s23, 0
          %s160 = scalar_select %p159, %s23, 0
          %s161 = scalar_lea.vmem %s2, %s160
        $region16: #{forward.1} parent=11 // pred_fallthru
          _
      $region12: #{forward.1} parent=5 // pred_fallthru
        _
      %p162 = scmp.lt.s32.totalorder %s12, 2
      // Predicated region
      $region17: #{forward.1} parent=5 // pred_check
        %p163 = pneg %p162
      $region18: #{forward.1} parent=5 // pred_check_branch
        %165 = sbr.rel (%p163) target = $region20
      $region19: #{forward.1} parent=5 // pred_region
        // Predicated region
        $region21: #{forward.1} parent=19 // pred_check
          %p166 = pneg %p53
        $region22: #{forward.1} parent=19 // pred_check_branch
          %168 = sbr.rel (%p166) target = $region24
        $region23: #{forward.1} parent=19 // pred_region
          %s169 = smul.u32 4, %s21
          %p170 = scmp.lt.s32.totalorder %s19, 0
          %s171 = scalar_select %p170, %s19, 0
          %p172 = scmp.lt.s32.totalorder %s169, 7
          %s173 = scalar_select %p172, %s169, 7
          %s174 = smul.addr %s171, 8
          %s175 = sadd.s32 %s173, %s174
          %s176 = smul.addr %s175, 8
          %s177 = scalar_lea.vmem %s0, %s176
          %s178 = smul.u32 4, %s21
        $region24: #{forward.1} parent=19 // pred_fallthru
          _
        // Predicated region
        $region25: #{forward.1} parent=19 // pred_check
          %p179 = pneg %p81
        $region26: #{forward.1} parent=19 // pred_check_branch
          %181 = sbr.rel (%p179) target = $region28
        $region27: #{forward.1} parent=19 // pred_region
          %s182 = sand.u32 %s71, 1
          %s183 = scalar_lea.sflag [#allocation4], %s182
          %s184 = sand.u32 %s71, 1
          %s185 = smul.addr %s184, 512
          %s186 = scalar_lea.vmem [#allocation3], %s185
          %s187 = smul.u32 64, %s21
          %s189 = ssub.s32 8192, 8192
          %190 = vsyncadd %s183, %s189
          %s191 = sadd.s32 %s20, %s187
          %s192 = smul.addr %s191, 128
          %s193 = scalar_lea.hbm %s1, %s192
          %s194 = sshll.u32 %s186, 4
          %s195 = int_to_ptr.vmem [resolvable:$true] %s194
          %200 = dma.hbm_to_vmem [thread:$0]  %s193, 8192, %s195, %s183, 128, 128, 8
        $region28: #{forward.1} parent=19 // pred_fallthru
          _
      $region20: #{forward.1} parent=5 // pred_fallthru
        _
      %p201 = scmp.le.s32.totalorder 1, %s12
      %p202 = scmp.lt.s32.totalorder %s12, 3
      %p203 = pnand %p201, %p202
      %p204 = pneg %p203
      // Predicated region
      $region29: #{forward.1} parent=5 // pred_check
        _
      $region30: #{forward.1} parent=5 // pred_check_branch
        %206 = sbr.rel (%p203) target = $region32
      $region31: #{forward.1} parent=5 // pred_region
        %s207 = ssub.s32 %s12, 1
        %s208 = sand.u32 %s74, 1
        %s209 = scalar_lea.sflag [#allocation4], %s208
        %s210 = sand.u32 %s74, 1
        %s211 = smul.addr %s210, 512
        %s212 = scalar_lea.vmem [#allocation3], %s211
        // Predicated region
        $region33: #{forward.1} parent=31 // pred_check
          %p213 = pneg %p87
        $region34: #{forward.1} parent=31 // pred_check_branch
          %215 = sbr.rel (%p213) target = $region36
        $region35: #{forward.1} parent=31 // pred_region
          %216 = dma.done %s209, 8192
        $region36: #{forward.1} parent=31 // pred_fallthru
          _
        %s217 = smul.u32 4, %s24
        %p218 = scmp.lt.s32.totalorder %s22, 0
        %s219 = scalar_select %p218, %s22, 0
        %p220 = scmp.lt.s32.totalorder %s217, 7
        %s221 = scalar_select %p220, %s217, 7
        %s222 = smul.addr %s219, 8
        %s223 = sadd.s32 %s221, %s222
        %s224 = smul.addr %s223, 8
        %s225 = scalar_lea.vmem %s0, %s224
        %p226 = pneg %p59
        %p227 = pneg %p56
        %s228 = sand.u32 %s74, 1
        %s229 = scalar_lea.sflag [#allocation4], %s228
        %s230 = sand.u32 %s74, 1
        %s231 = smul.addr %s230, 512
        %s232 = scalar_lea.vmem [#allocation3], %s231
        %p233 = pneg %p87
        %p234 = pneg %p84
        %p235 = scmp.lt.s32.totalorder %s23, 0
        %s236 = scalar_select %p235, %s23, 0
        %s237 = scalar_lea.vmem %s2, %s236
        %p238 = pneg %p113
        %p239 = pneg %p110
        %p240 = pneg %p141
        %p241 = pneg %p138
        %p242 = scmp.lt.s32.totalorder %s22, 0
        %s243 = scalar_select %p242, %s22, 0
        %p244 = scmp.lt.s32.totalorder %s23, 0
        %s245 = scalar_select %p244, %s23, 0
        %s246 = sadd.s32 %s245, %s243
        %s247 = smul.addr %s246, 8
        %s248 = scalar_lea.vmem %s3, %s247
        %s249 = smul.u32 4, %s24
        %p250 = scmp.lt.s32.totalorder %s22, 0
        %s251 = scalar_select %p250, %s22, 0
        %p252 = scmp.lt.s32.totalorder %s249, 7
        %s253 = scalar_select %p252, %s249, 7
        %s254 = smul.addr %s251, 8
        %s255 = sadd.s32 %s253, %s254
        %s256 = smul.addr %s255, 8
        %s257 = scalar_lea.vmem %s0, %s256
        %s258 = smul.u32 4, %s24
        %s259 = smul.u32 64, %s24
        %p260 = scmp.lt.s32.totalorder %s23, 0
        %s261 = scalar_select %p260, %s23, 0
        %s262 = scalar_lea.vmem %s2, %s261
        %p263 = scmp.lt.s32.totalorder %s22, 0
        %s264 = scalar_select %p263, %s22, 0
        %p265 = scmp.lt.s32.totalorder %s23, 0
        %s266 = scalar_select %p265, %s23, 0
        %s267 = sadd.s32 %s266, %s264
        %s268 = smul.addr %s267, 8
        %s269 = scalar_lea.vmem %s3, %s268
        %p270 = scmp.eq.s32.totalorder %s24, 0
        // Predicated region
        $region37: #{forward.1} parent=31 // pred_check
          %p271 = pneg %p270
        $region38: #{forward.1} parent=31 // pred_check_branch
          %273 = sbr.rel (%p271) target = $region40
        $region39: #{forward.1} parent=31 // pred_region
          %274 = vst [vmem:[#allocation2] sm:$0xff] 0.0
        $region40: #{forward.1} parent=31 // pred_fallthru
          _
        %v275 = vld [vmem:[#allocation2] sm:$0xff]
        %v276 = vld [vmem:[%s257] sm:$0xff]
        %v277 = vld [vmem:[%s257 + $0x8] sm:$0xff]
        %v278 = vld [vmem:[%s257 + $0x10] sm:$0xff]
        %v279 = vld [vmem:[%s257 + $0x18] sm:$0xff]
        %v280 = vld [vmem:[%s212] sm:$0xff]
        %v281 = vld [vmem:[%s212 + $0x8] sm:$0xff]
        %v282 = vld [vmem:[%s212 + $0x10] sm:$0xff]
        %v283 = vld [vmem:[%s212 + $0x18] sm:$0xff]
        %v284 = vld [vmem:[%s212 + $0x20] sm:$0xff]
        %v285 = vld [vmem:[%s212 + $0x28] sm:$0xff]
        %v286 = vld [vmem:[%s212 + $0x30] sm:$0xff]
        %v287 = vld [vmem:[%s212 + $0x38] sm:$0xff]
        %v288 = vld [vmem:[%s212 + $0x40] sm:$0xff]
        %v289 = vld [vmem:[%s212 + $0x48] sm:$0xff]
        %v290 = vld [vmem:[%s212 + $0x50] sm:$0xff]
        %v291 = vld [vmem:[%s212 + $0x58] sm:$0xff]
        %v292 = vld [vmem:[%s212 + $0x60] sm:$0xff]
        %v293 = vld [vmem:[%s212 + $0x68] sm:$0xff]
        %v294 = vld [vmem:[%s212 + $0x70] sm:$0xff]
        %v295 = vld [vmem:[%s212 + $0x78] sm:$0xff]
        %v296 = vld [vmem:[%s212 + $0x80] sm:$0xff]
        %v297 = vld [vmem:[%s212 + $0x88] sm:$0xff]
        %v298 = vld [vmem:[%s212 + $0x90] sm:$0xff]
        %v299 = vld [vmem:[%s212 + $0x98] sm:$0xff]
        %v300 = vld [vmem:[%s212 + $0xa0] sm:$0xff]
        %v301 = vld [vmem:[%s212 + $0xa8] sm:$0xff]
        %v302 = vld [vmem:[%s212 + $0xb0] sm:$0xff]
        %v303 = vld [vmem:[%s212 + $0xb8] sm:$0xff]
        %v304 = vld [vmem:[%s212 + $0xc0] sm:$0xff]
        %v305 = vld [vmem:[%s212 + $0xc8] sm:$0xff]
        %v306 = vld [vmem:[%s212 + $0xd0] sm:$0xff]
        %v307 = vld [vmem:[%s212 + $0xd8] sm:$0xff]
        %v308 = vld [vmem:[%s212 + $0xe0] sm:$0xff]
        %v309 = vld [vmem:[%s212 + $0xe8] sm:$0xff]
        %v310 = vld [vmem:[%s212 + $0xf0] sm:$0xff]
        %v311 = vld [vmem:[%s212 + $0xf8] sm:$0xff]
        %v312 = vld [vmem:[%s212 + $0x100] sm:$0xff]
        %v313 = vld [vmem:[%s212 + $0x108] sm:$0xff]
        %v314 = vld [vmem:[%s212 + $0x110] sm:$0xff]
        %v315 = vld [vmem:[%s212 + $0x118] sm:$0xff]
        %v316 = vld [vmem:[%s212 + $0x120] sm:$0xff]
        %v317 = vld [vmem:[%s212 + $0x128] sm:$0xff]
        %v318 = vld [vmem:[%s212 + $0x130] sm:$0xff]
        %v319 = vld [vmem:[%s212 + $0x138] sm:$0xff]
        %v320 = vld [vmem:[%s212 + $0x140] sm:$0xff]
        %v321 = vld [vmem:[%s212 + $0x148] sm:$0xff]
        %v322 = vld [vmem:[%s212 + $0x150] sm:$0xff]
        %v323 = vld [vmem:[%s212 + $0x158] sm:$0xff]
        %v324 = vld [vmem:[%s212 + $0x160] sm:$0xff]
        %v325 = vld [vmem:[%s212 + $0x168] sm:$0xff]
        %v326 = vld [vmem:[%s212 + $0x170] sm:$0xff]
        %v327 = vld [vmem:[%s212 + $0x178] sm:$0xff]
        %v328 = vld [vmem:[%s212 + $0x180] sm:$0xff]
        %v329 = vld [vmem:[%s212 + $0x188] sm:$0xff]
        %v330 = vld [vmem:[%s212 + $0x190] sm:$0xff]
        %v331 = vld [vmem:[%s212 + $0x198] sm:$0xff]
        %v332 = vld [vmem:[%s212 + $0x1a0] sm:$0xff]
        %v333 = vld [vmem:[%s212 + $0x1a8] sm:$0xff]
        %v334 = vld [vmem:[%s212 + $0x1b0] sm:$0xff]
        %v335 = vld [vmem:[%s212 + $0x1b8] sm:$0xff]
        %v336 = vld [vmem:[%s212 + $0x1c0] sm:$0xff]
        %v337 = vld [vmem:[%s212 + $0x1c8] sm:$0xff]
        %v338 = vld [vmem:[%s212 + $0x1d0] sm:$0xff]
        %v339 = vld [vmem:[%s212 + $0x1d8] sm:$0xff]
        %v340 = vld [vmem:[%s212 + $0x1e0] sm:$0xff]
        %v341 = vld [vmem:[%s212 + $0x1e8] sm:$0xff]
        %v342 = vld [vmem:[%s212 + $0x1f0] sm:$0xff]
        %v343 = vld [vmem:[%s212 + $0x1f8] sm:$0xff]
        %344 = vmatprep.subr.mxu0 0.0
        %345 = vmatpush1.msra.mxu0 %v280
        %346 = vmatprep.subr.mxu0 0.0
        %347 = vmatpush1.msra.mxu0 %v281
        %348 = vmatprep.subr.mxu0 0.0
        %349 = vmatpush1.msra.mxu0 %v282
        %350 = vmatprep.subr.mxu0 0.0
        %351 = vmatpush1.msra.mxu0 %v283
        %352 = vmatprep.subr.mxu0 0.0
        %353 = vmatpush1.msra.mxu0 %v284
        %354 = vmatprep.subr.mxu0 0.0
        %355 = vmatpush1.msra.mxu0 %v285
        %356 = vmatprep.subr.mxu0 0.0
        %357 = vmatpush1.msra.mxu0 %v286
        %358 = vmatprep.subr.mxu0 0.0
        %359 = vmatpush1.msra.mxu0 %v287
        %360 = vmatprep.subr.mxu0 0.0
        %361 = vmatpush1.msra.mxu0 %v288
        %362 = vmatprep.subr.mxu0 0.0
        %363 = vmatpush1.msra.mxu0 %v289
        %364 = vmatprep.subr.mxu0 0.0
        %365 = vmatpush1.msra.mxu0 %v290
        %366 = vmatprep.subr.mxu0 0.0
        %367 = vmatpush1.msra.mxu0 %v291
        %368 = vmatprep.subr.mxu0 0.0
        %369 = vmatpush1.msra.mxu0 %v292
        %370 = vmatprep.subr.mxu0 0.0
        %371 = vmatpush1.msra.mxu0 %v293
        %372 = vmatprep.subr.mxu0 0.0
        %373 = vmatpush1.msra.mxu0 %v294
        %374 = vmatprep.subr.mxu0 0.0
        %375 = vmatpush1.msra.mxu0 %v295
        %376 = vmatprep.subr.mxu0 0.0
        %377 = vmatpush1.msra.mxu0 %v296
        %378 = vmatprep.subr.mxu0 0.0
        %379 = vmatpush1.msra.mxu0 %v297
        %380 = vmatprep.subr.mxu0 0.0
        %381 = vmatpush1.msra.mxu0 %v298
        %382 = vmatprep.subr.mxu0 0.0
        %383 = vmatpush1.msra.mxu0 %v299
        %384 = vmatprep.subr.mxu0 0.0
        %385 = vmatpush1.msra.mxu0 %v300
        %386 = vmatprep.subr.mxu0 0.0
        %387 = vmatpush1.msra.mxu0 %v301
        %388 = vmatprep.subr.mxu0 0.0
        %389 = vmatpush1.msra.mxu0 %v302
        %390 = vmatprep.subr.mxu0 0.0
        %391 = vmatpush1.msra.mxu0 %v303
        %392 = vmatprep.subr.mxu0 0.0
        %393 = vmatpush1.msra.mxu0 %v304
        %394 = vmatprep.subr.mxu0 0.0
        %395 = vmatpush1.msra.mxu0 %v305
        %396 = vmatprep.subr.mxu0 0.0
        %397 = vmatpush1.msra.mxu0 %v306
        %398 = vmatprep.subr.mxu0 0.0
        %399 = vmatpush1.msra.mxu0 %v307
        %400 = vmatprep.subr.mxu0 0.0
        %401 = vmatpush1.msra.mxu0 %v308
        %402 = vmatprep.subr.mxu0 0.0
        %403 = vmatpush1.msra.mxu0 %v309
        %404 = vmatprep.subr.mxu0 0.0
        %405 = vmatpush1.msra.mxu0 %v310
        %406 = vmatprep.subr.mxu0 0.0
        %407 = vmatpush1.msra.mxu0 %v311
        %408 = vmatprep.mubr.f32.mxu0 %v277
        %409 = vmatmul.mubr.f32.gmra.mrb[0].mxu0 %v276
        %v410 = vpop.f32.mrb[0].mxu0
        %v411 = vadd.f32 0.0, %v410
        %v412 = vpop.f32.mrb[0].mxu0
        %413 = vdwg.mxu0
        %414 = vmatprep.subr.mxu0 0.0
        %415 = vmatpush1.msra.mxu0 %v312
        %416 = vmatprep.subr.mxu0 0.0
        %417 = vmatpush1.msra.mxu0 %v313
        %418 = vmatprep.subr.mxu0 0.0
        %419 = vmatpush1.msra.mxu0 %v314
        %420 = vmatprep.subr.mxu0 0.0
        %421 = vmatpush1.msra.mxu0 %v315
        %422 = vmatprep.subr.mxu0 0.0
        %423 = vmatpush1.msra.mxu0 %v316
        %424 = vmatprep.subr.mxu0 0.0
        %425 = vmatpush1.msra.mxu0 %v317
        %426 = vmatprep.subr.mxu0 0.0
        %427 = vmatpush1.msra.mxu0 %v318
        %428 = vmatprep.subr.mxu0 0.0
        %429 = vmatpush1.msra.mxu0 %v319
        %430 = vmatprep.subr.mxu0 0.0
        %431 = vmatpush1.msra.mxu0 %v320
        %432 = vmatprep.subr.mxu0 0.0
        %433 = vmatpush1.msra.mxu0 %v321
        %434 = vmatprep.subr.mxu0 0.0
        %435 = vmatpush1.msra.mxu0 %v322
        %436 = vmatprep.subr.mxu0 0.0
        %437 = vmatpush1.msra.mxu0 %v323
        %438 = vmatprep.subr.mxu0 0.0
        %439 = vmatpush1.msra.mxu0 %v324
        %440 = vmatprep.subr.mxu0 0.0
        %441 = vmatpush1.msra.mxu0 %v325
        %442 = vmatprep.subr.mxu0 0.0
        %443 = vmatpush1.msra.mxu0 %v326
        %444 = vmatprep.subr.mxu0 0.0
        %445 = vmatpush1.msra.mxu0 %v327
        %446 = vmatprep.subr.mxu0 0.0
        %447 = vmatpush1.msra.mxu0 %v328
        %448 = vmatprep.subr.mxu0 0.0
        %449 = vmatpush1.msra.mxu0 %v329
        %450 = vmatprep.subr.mxu0 0.0
        %451 = vmatpush1.msra.mxu0 %v330
        %452 = vmatprep.subr.mxu0 0.0
        %453 = vmatpush1.msra.mxu0 %v331
        %454 = vmatprep.subr.mxu0 0.0
        %455 = vmatpush1.msra.mxu0 %v332
        %456 = vmatprep.subr.mxu0 0.0
        %457 = vmatpush1.msra.mxu0 %v333
        %458 = vmatprep.subr.mxu0 0.0
        %459 = vmatpush1.msra.mxu0 %v334
        %460 = vmatprep.subr.mxu0 0.0
        %461 = vmatpush1.msra.mxu0 %v335
        %462 = vmatprep.subr.mxu0 0.0
        %463 = vmatpush1.msra.mxu0 %v336
        %464 = vmatprep.subr.mxu0 0.0
        %465 = vmatpush1.msra.mxu0 %v337
        %466 = vmatprep.subr.mxu0 0.0
        %467 = vmatpush1.msra.mxu0 %v338
        %468 = vmatprep.subr.mxu0 0.0
        %469 = vmatpush1.msra.mxu0 %v339
        %470 = vmatprep.subr.mxu0 0.0
        %471 = vmatpush1.msra.mxu0 %v340
        %472 = vmatprep.subr.mxu0 0.0
        %473 = vmatpush1.msra.mxu0 %v341
        %474 = vmatprep.subr.mxu0 0.0
        %475 = vmatpush1.msra.mxu0 %v342
        %476 = vmatprep.subr.mxu0 0.0
        %477 = vmatpush1.msra.mxu0 %v343
        %478 = vmatprep.mubr.f32.mxu0 %v279
        %479 = vmatmul.mubr.f32.gmra.mrb[0].mxu0 %v278
        %v480 = vpop.f32.mrb[0].mxu0
        %v481 = vadd.f32 %v411, %v480
        %v482 = vpop.f32.mrb[0].mxu0
        %483 = vdwg.mxu0
        %v484 = vadd.f32 %v275, %v481
        %485 = vst [vmem:[#allocation2] sm:$0xff] %v484
        %p486 = scmp.eq.s32.totalorder %s24, 1
        // Predicated region
        $region41: #{forward.1} parent=31 // pred_check
          %p487 = pneg %p486
        $region42: #{forward.1} parent=31 // pred_check_branch
          %489 = sbr.rel (%p487) target = $region44
        $region43: #{forward.1} parent=31 // pred_region
          %v490 = vld [vmem:[#allocation2] sm:$0xff]
          %v491 = vld [vmem:[%s262] sm:$0x1]
          %v493 = vlaneseq
          %v494 = vshrl.u32 %v493, 7
          %v495 = vsub.s32 0, %v494
          %v496 = vrot.slane %v491, %v495
          %v498 = vadd.f32 %v490, %v496
          %499 = vst [vmem:[%s269] sm:$0xff] %v498
        $region44: #{forward.1} parent=31 // pred_fallthru
          _
        %p500 = scmp.lt.s32.totalorder %s22, 0
        %s501 = scalar_select %p500, %s22, 0
        %p502 = scmp.lt.s32.totalorder %s23, 0
        %s503 = scalar_select %p502, %s23, 0
        %s504 = sadd.s32 %s503, %s501
        %s505 = smul.addr %s504, 8
        %s506 = scalar_lea.vmem %s3, %s505
        // Predicated region
        $region45: #{forward.1} parent=31 // pred_check
          %p507 = pneg %p138
        $region46: #{forward.1} parent=31 // pred_check_branch
          %509 = sbr.rel (%p507) target = $region48
        $region47: #{forward.1} parent=31 // pred_region
          _
        $region48: #{forward.1} parent=31 // pred_fallthru
          _
        // Predicated region
        $region49: #{forward.1} parent=31 // pred_check
          %p510 = pneg %p138
        $region50: #{forward.1} parent=31 // pred_check_branch
          %512 = sbr.rel (%p510) target = $region52
        $region51: #{forward.1} parent=31 // pred_region
          %p513 = scmp.lt.s32.totalorder %s22, 0
          %s514 = scalar_select %p513, %s22, 0
          %p515 = scmp.lt.s32.totalorder %s23, 0
          %s516 = scalar_select %p515, %s23, 0
          %s517 = sadd.s32 %s516, %s514
          %s518 = smul.addr %s517, 8
          %s519 = scalar_lea.vmem %s3, %s518
        $region52: #{forward.1} parent=31 // pred_fallthru
          _
      $region32: #{forward.1} parent=5 // pred_fallthru
        _
      %p520 = scmp.le.s32.totalorder 2, %s12
      // Predicated region
      $region53: #{forward.1} parent=5 // pred_check
        %p521 = pneg %p520
      $region54: #{forward.1} parent=5 // pred_check_branch
        %523 = sbr.rel (%p521) target = $region56
      $region55: #{forward.1} parent=5 // pred_region
        %s524 = ssub.s32 %s12, 2
      $region56: #{forward.1} parent=5 // pred_fallthru
        _
    $region6: #{forward.1} parent=1 // loop_footer
      %s16 = sadd.s32 1, %s12
    $region7: #{forward.1} parent=1 // loop_footer_branch
      %11 = sbr.rel target = $region3
    $region8: #{forward.1} parent=1 // loop_exit
      _
    %525 = vsyncpa [#allocation4], 1
    %s526 = scalar_lea.sflag [#allocation4], 1
    %527 = vsyncpa %s526, 1

</llo_original>
